<compile_context>
chip_gen: v7x
topology: tpu7x:2x2x1
jax: 0.10.0
libtpu: 0.0.40
codegen_flags: <defaults>
</compile_context>

<pallas_src>
import functools
import math

import numpy as np
import jax
import jax.numpy as jnp
from jax.experimental import pallas as pl
from jax.experimental.pallas import tpu as pltpu


def _cdiv(a, b):
    return -(-a // b)


def _round_up(x, m):
    return _cdiv(x, m) * m


# ----------------------------------------------------------------------------
# Fused GatedPooling kernel
# ----------------------------------------------------------------------------

def _gated_pooling_kernel(x_ref, seg_ref, wg_ref, bg_ref, wp_ref, bp_ref,
                          out_ref, acc_ref, *, n_nodes, num_graphs,
                          tiles_per_split, use_bf16, needs_mask):
    """grid = (num_splits [parallel], tiles_per_split [arbitrary, reduction]).

    Each split accumulates its node tiles into a private fp32 (B, D) VMEM accumulator and
    writes a private partial (B, P) output block on its last tile; partials are summed in a
    tiny wrapper epilogue (correct megacore pattern - no shared accumulator across cores).
    """
    s = pl.program_id(0)          # split index (parallel across TensorCores on v7x)
    t = pl.program_id(1)          # node-tile index within the split (serial reduction)
    tile = x_ref.shape[0]

    @pl.when(t == 0)
    def _():
        acc_ref[...] = jnp.zeros_like(acc_ref)

    x = x_ref[...]                                           # (tile, D), f32 or bf16

    if needs_mask:
        # Mask x itself (not just the seg ids / gate): garbage or NaN rows past N must be
        # zeroed BEFORE any multiply, otherwise 0 * NaN would poison the accumulation.
        row0 = (s * tiles_per_split + t) * tile
        row_ids = jax.lax.broadcasted_iota(jnp.int32, (tile, 1), 0) + row0
        x = jnp.where(row_ids < n_nodes, x, jnp.zeros((), x.dtype))

    # gate_i = <x_i, w_gate> + b_gate : promotes to f32 (VPU mul + XLU row-reduce; keeps the
    # MXU free for the segment-sum matmul - an output width of 1 would waste MXU lanes).
    gate = jnp.sum(x * wg_ref[...], axis=1, keepdims=True) + bg_ref[...]   # (tile, 1) f32
    gated = x * gate                                          # (tile, D) f32; 0 on masked rows
    # TODO(synk): for large node_dim, fold `gate` into the one-hot operand instead of scaling
    #             x (saves this (tile, D) multiply); irrelevant while the kernel is HBM-bound.

    # Segment-sum as a one-hot matmul on the MXU: onehot (B, tile) @ gated (tile, D).
    # ids outside [0, num_graphs) simply never match -> silently dropped.
    seg = seg_ref[...]                                        # (1, tile) int32
    gids = jax.lax.broadcasted_iota(jnp.int32, (num_graphs, tile), 0)
    onehot = (gids == seg)                                    # (B, tile) bool

    mm_dtype = jnp.bfloat16 if use_bf16 else jnp.float32
    contrib = jnp.dot(onehot.astype(mm_dtype), gated.astype(mm_dtype),
                      preferred_element_type=jnp.float32)
    acc_ref[...] += contrib                                   # fp32 accumulation

    # Finalize this split: partial pool -> final linear -> partial output block.
    @pl.when(t == pl.num_programs(1) - 1)
    def _():
        pool = acc_ref[...]                                   # (B, D) fp32 partial pool
        bias = bp_ref[...] * (s == 0).astype(jnp.float32)     # bias added exactly once
        out = jnp.dot(pool, wp_ref[...], preferred_element_type=jnp.float32) + bias
        out_ref[...] = out.astype(out_ref.dtype)


def gated_pooling_forward(params, node_features, batch_list, num_graphs, *,
                          tile=1024, num_splits=1, use_bf16=None,
                          vmem_budget_bytes=12 * 1024 * 1024):
    """node_features: (N, node_dim) f32 or bf16 (fed to the kernel in native dtype - no
    wrapper-side cast); batch_list: (N,) int graph ids in [0, num_graphs)."""
    N, D = node_features.shape
    P = params["w_pool"].shape[1]
    x_dtype = jnp.dtype(node_features.dtype)
    if use_bf16 is None:                                      # auto: bf16 MXU iff input is bf16
        use_bf16 = (x_dtype == jnp.dtype(jnp.bfloat16))

    # ---- tile sizing: multiples of 128 rows, capped by N and by a VMEM working-set budget
    #      (2x double-buffered x tile + 2x seg row + accumulator + weights), so the same code
    #      respects v7x's 64 MiB VMEM at realistic node_dim.
    itemsize = int(x_dtype.itemsize)
    per_row = 2 * D * itemsize + 2 * 4                        # x (dbl-buffered) + seg (dbl-buffered)
    max_rows = max(128, (vmem_budget_bytes // per_row) // 128 * 128)
    tile = max(128, (int(tile) // 128) * 128)                 # keep lane/sublane alignment
    tile = min(tile, max_rows, _round_up(N, 128))

    total_tiles = _cdiv(N, tile)
    num_splits = max(1, min(int(num_splits), total_tiles))
    tiles_per_split = _cdiv(total_tiles, num_splits)
    coverage = num_splits * tiles_per_split * tile
    needs_mask = (coverage != N)                              # statically skip mask when exact

    seg_row = batch_list.reshape(1, N).astype(jnp.int32)

    last_tile = total_tiles - 1

    def x_map(s, t):
        return (jnp.minimum(s * tiles_per_split + t, last_tile), 0)

    def seg_map(s, t):
        return (0, jnp.minimum(s * tiles_per_split + t, last_tile))

    kern = functools.partial(_gated_pooling_kernel, n_nodes=N, num_graphs=num_graphs,
                             tiles_per_split=tiles_per_split, use_bf16=use_bf16,
                             needs_mask=needs_mask)

    # VMEM limit with headroom (never below the default scoped limit, never near v7x physical).
    fixed_bytes = num_graphs * D * 4 + D * P * 4 + (D + 2 * P + 2) * 4 + num_graphs * P * 4
    est = 2 * tile * D * itemsize + 2 * tile * 4 + fixed_bytes
    vmem_limit = int(min(max(2 * est + (4 << 20), 32 << 20), 48 << 20))

    partial = pl.pallas_call(
        kern,
        out_shape=jax.ShapeDtypeStruct((num_splits, num_graphs, P), jnp.float32),
        grid=(num_splits, tiles_per_split),
        in_specs=[
            pl.BlockSpec((tile, D), x_map),                   # node-feature tile (native dtype)
            pl.BlockSpec((1, tile), seg_map),                 # batch ids for this tile (lane axis)
            pl.BlockSpec((1, D), lambda s, t: (0, 0)),        # w_gate (pre-reshaped row)
            pl.BlockSpec((1, 1), lambda s, t: (0, 0)),        # b_gate
            pl.BlockSpec((D, P), lambda s, t: (0, 0)),        # w_pool ((in, out) layout)
            pl.BlockSpec((1, P), lambda s, t: (0, 0)),        # b_pool
        ],
        out_specs=pl.BlockSpec((None, num_graphs, P), lambda s, t: (s, 0, 0)),
        scratch_shapes=[pltpu.VMEM((num_graphs, D), jnp.float32)],
        compiler_params=pltpu.CompilerParams(
            # split axis is parallel (uses both v7x TensorCores, each with its own
            # accumulator + output block); the node/reduction axis stays arbitrary.
            dimension_semantics=("parallel", "arbitrary"),
            vmem_limit_bytes=vmem_limit),
    )(node_features, seg_row,
      params["w_gate"], params["b_gate"], params["w_pool"], params["b_pool"])

    if num_splits == 1:
        return partial[0]
    return jnp.sum(partial, axis=0)                           # tiny (S, B, P) epilogue sum


# ----------------------------------------------------------------------------
# Parameter init (kernel-ready layouts, hoisted out of the forward)
# ----------------------------------------------------------------------------

def init_gated_pooling_params(key, node_dim, pooling_dim):
    k1, k2, k3, k4 = jax.random.split(key, 4)
    bound = 1.0 / math.sqrt(node_dim)     # nn.Linear default init: U(-1/sqrt(fan_in), +)
    w_gate = jax.random.uniform(k1, (1, node_dim), jnp.float32, -bound, bound)
    b_gate = jax.random.uniform(k2, (1, 1), jnp.float32, -bound, bound)
    w_pool = jax.random.uniform(k3, (node_dim, pooling_dim), jnp.float32, -bound, bound)
    b_pool = jax.random.uniform(k4, (1, pooling_dim), jnp.float32, -bound, bound)
    # TODO(synk): htheta_node (Linear+ReLU) exists in the PyTorch module but is unused in
    #             forward(); it is deliberately not instantiated here.
    return dict(w_gate=w_gate, b_gate=b_gate, w_pool=w_pool, b_pool=b_pool)


# ----------------------------------------------------------------------------
# Pure-JAX reference (for correctness check)
# ----------------------------------------------------------------------------

def gated_pooling_reference(params, node_features, batch_list, num_graphs):
    x = node_features.astype(jnp.float32)
    gate = x @ params["w_gate"].reshape(-1, 1) + params["b_gate"].reshape(1, 1)
    gated = gate * x
    onehot = (jnp.arange(num_graphs)[:, None] == batch_list[None, :]).astype(jnp.float32)
    pool = onehot @ gated
    return pool @ params["w_pool"] + params["b_pool"]


# ----------------------------------------------------------------------------
# main
# ----------------------------------------------------------------------------

if __name__ == "__main__":
    node_dim, pooling_dim, num_graphs = 32, 16, 4

    root = jax.random.PRNGKey(0)
    kp, kx1, kb1, kx2, kb2, kx3, kb3 = jax.random.split(root, 7)
    params = init_gated_pooling_params(kp, node_dim, pooling_dim)

    # --- Test 1: f32 nodes, N not a multiple of the tile (exercises the masked partial tile).
    n1 = 200
    x1 = jax.random.normal(kx1, (n1, node_dim), jnp.float32)
    b1 = jnp.sort(jax.random.randint(kb1, (n1,), 0, num_graphs, jnp.int32))
    fwd1 = jax.jit(functools.partial(gated_pooling_forward, num_graphs=num_graphs))
    out1 = jax.block_until_ready(fwd1(params, x1, b1))
    assert out1.shape == (num_graphs, pooling_dim)
    ref1 = gated_pooling_reference(params, x1, b1, num_graphs)
    np.testing.assert_allclose(np.asarray(out1), np.asarray(ref1), rtol=1e-4, atol=1e-4)

    # --- Test 2: f32 nodes, exact tile coverage (mask statically skipped) + 2-way node-axis
    #             split with per-split partial accumulators (the v7x dual-TensorCore path;
    #             runs serially and stays correct on v5e/v6e).
    n2 = 1024
    x2 = jax.random.normal(kx2, (n2, node_dim), jnp.float32)
    b2 = jnp.sort(jax.random.randint(kb2, (n2,), 0, num_graphs, jnp.int32))
    fwd2 = jax.jit(functools.partial(gated_pooling_forward, num_graphs=num_graphs,
                                     tile=512, num_splits=2))
    out2 = jax.block_until_ready(fwd2(params, x2, b2))
    ref2 = gated_pooling_reference(params, x2, b2, num_graphs)
    np.testing.assert_allclose(np.asarray(out2), np.asarray(ref2), rtol=1e-3, atol=1e-3)

    # --- Test 3: bf16 nodes fed straight into the kernel (no wrapper-side f32 cast), bf16 MXU
    #             segment-sum, 2 splits with an uneven tile count (exercises index clamping
    #             and the fully-masked overshoot tile).
    n3 = 3000
    x3 = jax.random.normal(kx3, (n3, node_dim), jnp.float32).astype(jnp.bfloat16)
    b3 = jnp.sort(jax.random.randint(kb3, (n3,), 0, num_graphs, jnp.int32))
    fwd3 = jax.jit(functools.partial(gated_pooling_forward, num_graphs=num_graphs,
                                     tile=1024, num_splits=2))
    out3 = jax.block_until_ready(fwd3(params, x3, b3))
    ref3 = gated_pooling_reference(params, x3, b3, num_graphs)
    np.testing.assert_allclose(np.asarray(out3), np.asarray(ref3), rtol=5e-2, atol=5e-1)

    print("KERNEL_OK")
</pallas_src>

<mosaic_0001>
module attributes {stable_mosaic.version = 11 : i64} {
  func.func @_gated_pooling_kernel(%arg0: i32, %arg1: i32, %arg2: memref<256x32xf32, #tpu.memory_space<vmem>>, %arg3: memref<1x256xi32, #tpu.memory_space<vmem>>, %arg4: memref<1x32xf32, #tpu.memory_space<vmem>>, %arg5: memref<1x1xf32, #tpu.memory_space<vmem>>, %arg6: memref<32x16xf32, #tpu.memory_space<vmem>>, %arg7: memref<1x16xf32, #tpu.memory_space<vmem>>, %arg8: memref<1x4x16xf32, #tpu.memory_space<vmem>>, %arg9: memref<4x32xf32, #tpu.memory_space<vmem>>) attributes {dimension_semantics = [#tpu.dimension_semantics<parallel>, #tpu.dimension_semantics<arbitrary>], iteration_bounds = array<i64: 1, 1>, scalar_prefetch = 0 : i64, scratch_operands = 1 : i64, tpu.core_type = #tpu.core_type<tc>, window_params = [{transform_indices = @transform_0, window_bounds = array<i64: 256, 32>}, {transform_indices = @transform_1, window_bounds = array<i64: 1, 256>}, {pipeline_mode = #tpu.pipeline_mode<synchronous>, transform_indices = @transform_2, window_bounds = array<i64: 1, 32>}, {pipeline_mode = #tpu.pipeline_mode<synchronous>, transform_indices = @transform_3, window_bounds = array<i64: 1, 1>}, {pipeline_mode = #tpu.pipeline_mode<synchronous>, transform_indices = @transform_4, window_bounds = array<i64: 32, 16>}, {pipeline_mode = #tpu.pipeline_mode<synchronous>, transform_indices = @transform_5, window_bounds = array<i64: 1, 16>}, {transform_indices = @transform_6, window_bounds = array<i64: 1, 4, 16>}]} {
    %c0_i32 = arith.constant 0 : i32
    %0 = arith.cmpi eq, %arg1, %c0_i32 : i32
    %1 = arith.extui %0 : i1 to i32
    %c0_i32_0 = arith.constant 0 : i32
    %2 = arith.cmpi ne, %1, %c0_i32_0 : i32
    scf.if %2 {
      %cst_16 = arith.constant 0.000000e+00 : f32
      %39 = vector.broadcast %cst_16 : f32 to vector<4x32xf32>
      %c0_17 = arith.constant 0 : index
      %c0_18 = arith.constant 0 : index
      %40 = vector.load %arg9[%c0_17, %c0_18] : memref<4x32xf32, #tpu.memory_space<vmem>>, vector<4x32xf32>
      tpu.vector_store %arg9[%c0_17, %c0_18], %39 {strides = array<i32>} : memref<4x32xf32, #tpu.memory_space<vmem>>, vector<4x32xf32>,
    } else {
    }
    %c0 = arith.constant 0 : index
    %c0_1 = arith.constant 0 : index
    %3 = vector.load %arg2[%c0, %c0_1] : memref<256x32xf32, #tpu.memory_space<vmem>>, vector<256x32xf32>
    %c1_i32 = arith.constant 1 : i32
    %4 = arith.muli %arg0, %c1_i32 : i32
    %5 = arith.addi %4, %arg1 : i32
    %c256_i32 = arith.constant 256 : i32
    %6 = arith.muli %5, %c256_i32 : i32
    %7 = tpu.iota {dimensions = array<i32: 0>} : vector<256x1xi32>
    %8 = vector.broadcast %6 : i32 to vector<256x1xi32>
    %9 = arith.addi %7, %8 : vector<256x1xi32>
    %c200_i32 = arith.constant 200 : i32
    %10 = vector.broadcast %c200_i32 : i32 to vector<256x1xi32>
    %11 = arith.cmpi slt, %9, %10 : vector<256x1xi32>
    %cst = arith.constant 0.000000e+00 : f32
    %12 = vector.shape_cast %11 : vector<256x1xi1> to vector<256x1xi1>
    %13 = vector.broadcast %12 : vector<256x1xi1> to vector<256x32xi1>
    %14 = vector.broadcast %cst : f32 to vector<256x32xf32>
    %15 = arith.select %13, %3, %14 : vector<256x32xi1>, vector<256x32xf32>
    %c0_2 = arith.constant 0 : index
    %c0_3 = arith.constant 0 : index
    %16 = vector.load %arg4[%c0_2, %c0_3] : memref<1x32xf32, #tpu.memory_space<vmem>>, vector<1x32xf32>
    %17 = vector.broadcast %16 : vector<1x32xf32> to vector<256x32xf32>
    %18 = arith.mulf %15, %17 : vector<256x32xf32>
    %cst_4 = arith.constant dense<0.000000e+00> : vector<256xf32>
    %19 = vector.multi_reduction <add>, %18, %cst_4 [1] : vector<256x32xf32> to vector<256xf32>
    %20 = vector.shape_cast %19 : vector<256xf32> to vector<256x1xf32>
    %c0_5 = arith.constant 0 : index
    %c0_6 = arith.constant 0 : index
    %21 = vector.load %arg5[%c0_5, %c0_6] : memref<1x1xf32, #tpu.memory_space<vmem>>, vector<1x1xf32>
    %22 = vector.broadcast %21 : vector<1x1xf32> to vector<256x1xf32>
    %23 = arith.addf %20, %22 : vector<256x1xf32>
    %24 = vector.broadcast %23 : vector<256x1xf32> to vector<256x32xf32>
    %25 = arith.mulf %15, %24 : vector<256x32xf32>
    %c0_7 = arith.constant 0 : index
    %c0_8 = arith.constant 0 : index
    %26 = vector.load %arg3[%c0_7, %c0_8] : memref<1x256xi32, #tpu.memory_space<vmem>>, vector<1x256xi32>
    %27 = tpu.iota {dimensions = array<i32: 0>} : vector<4x256xi32>
    %28 = vector.broadcast %26 : vector<1x256xi32> to vector<4x256xi32>
    %29 = arith.cmpi eq, %27, %28 : vector<4x256xi32>
    %30 = arith.extui %29 : vector<4x256xi1> to vector<4x256xi32>
    %31 = arith.sitofp %30 : vector<4x256xi32> to vector<4x256xf32>
    %cst_9 = arith.constant dense<0.000000e+00> : vector<4x32xf32>
    %32 = tpu.matmul %31, %25, %cst_9 {dimension_numbers = #tpu.dot_dimension_numbers<[1], [0], [0], [1], [0, 0, 1, 1], [], []>} : vector<4x256xf32>, vector<256x32xf32>, vector<4x32xf32> -> vector<4x32xf32>
    %c0_10 = arith.constant 0 : index
    %c0_11 = arith.constant 0 : index
    %33 = vector.load %arg9[%c0_10, %c0_11] : memref<4x32xf32, #tpu.memory_space<vmem>>, vector<4x32xf32>
    %34 = arith.addf %33, %32 : vector<4x32xf32>
    %c0_12 = arith.constant 0 : index
    %c0_13 = arith.constant 0 : index
    %35 = vector.load %arg9[%c0_12, %c0_13] : memref<4x32xf32, #tpu.memory_space<vmem>>, vector<4x32xf32>
    tpu.vector_store %arg9[%c0_12, %c0_13], %34 {strides = array<i32>} : memref<4x32xf32, #tpu.memory_space<vmem>>, vector<4x32xf32>,
    %c0_i32_14 = arith.constant 0 : i32
    %36 = arith.cmpi eq, %arg1, %c0_i32_14 : i32
    %37 = arith.extui %36 : i1 to i32
    %c0_i32_15 = arith.constant 0 : i32
    %38 = arith.cmpi ne, %37, %c0_i32_15 : i32
    scf.if %38 {
      %c0_16 = arith.constant 0 : index
      %c0_17 = arith.constant 0 : index
      %39 = vector.load %arg9[%c0_16, %c0_17] : memref<4x32xf32, #tpu.memory_space<vmem>>, vector<4x32xf32>
      %c0_18 = arith.constant 0 : index
      %c0_19 = arith.constant 0 : index
      %40 = vector.load %arg7[%c0_18, %c0_19] : memref<1x16xf32, #tpu.memory_space<vmem>>, vector<1x16xf32>
      %c0_i32_20 = arith.constant 0 : i32
      %41 = arith.cmpi eq, %arg0, %c0_i32_20 : i32
      %42 = arith.extui %41 : i1 to i32
      %43 = arith.sitofp %42 : i32 to f32
      %44 = vector.broadcast %43 : f32 to vector<1x16xf32>
      %45 = arith.mulf %40, %44 : vector<1x16xf32>
      %c0_21 = arith.constant 0 : index
      %c0_22 = arith.constant 0 : index
      %46 = vector.load %arg6[%c0_21, %c0_22] : memref<32x16xf32, #tpu.memory_space<vmem>>, vector<32x16xf32>
      %cst_23 = arith.constant dense<0.000000e+00> : vector<4x16xf32>
      %47 = tpu.matmul %39, %46, %cst_23 {dimension_numbers = #tpu.dot_dimension_numbers<[1], [0], [0], [1], [0, 0, 1, 1], [], []>} : vector<4x32xf32>, vector<32x16xf32>, vector<4x16xf32> -> vector<4x16xf32>
      %48 = vector.broadcast %45 : vector<1x16xf32> to vector<4x16xf32>
      %49 = arith.addf %47, %48 : vector<4x16xf32>
      %c0_24 = arith.constant 0 : index
      %c0_25 = arith.constant 0 : index
      %c0_26 = arith.constant 0 : index
      %50 = vector.load %arg8[%c0_24, %c0_25, %c0_26] : memref<1x4x16xf32, #tpu.memory_space<vmem>>, vector<1x4x16xf32>
      %51 = vector.shape_cast %50 : vector<1x4x16xf32> to vector<4x16xf32>
      %52 = vector.shape_cast %49 : vector<4x16xf32> to vector<1x4x16xf32>
      tpu.vector_store %arg8[%c0_24, %c0_25, %c0_26], %52 {strides = array<i32>} : memref<1x4x16xf32, #tpu.memory_space<vmem>>, vector<1x4x16xf32>,
    } else {
    }
    return
  }
  func.func @transform_0(%arg0: i32, %arg1: i32) -> (i32, i32) {
    %c1_i32 = arith.constant 1 : i32
    %0 = arith.muli %arg0, %c1_i32 : i32
    %1 = arith.addi %0, %arg1 : i32
    %c0_i32 = arith.constant 0 : i32
    %2 = arith.minsi %1, %c0_i32 : i32
    %c0_i32_0 = arith.constant 0 : i32
    %c0_i32_1 = arith.constant 0 : i32
    return %2, %c0_i32_0 : i32, i32
  }
  func.func @transform_1(%arg0: i32, %arg1: i32) -> (i32, i32) {
    %c1_i32 = arith.constant 1 : i32
    %0 = arith.muli %arg0, %c1_i32 : i32
    %1 = arith.addi %0, %arg1 : i32
    %c0_i32 = arith.constant 0 : i32
    %2 = arith.minsi %1, %c0_i32 : i32
    %c0_i32_0 = arith.constant 0 : i32
    %c0_i32_1 = arith.constant 0 : i32
    return %c0_i32_0, %2 : i32, i32
  }
  func.func @transform_2(%arg0: i32, %arg1: i32) -> (i32, i32) {
    %c0_i32 = arith.constant 0 : i32
    %c0_i32_0 = arith.constant 0 : i32
    %c0_i32_1 = arith.constant 0 : i32
    return %c0_i32, %c0_i32_0 : i32, i32
  }
  func.func @transform_3(%arg0: i32, %arg1: i32) -> (i32, i32) {
    %c0_i32 = arith.constant 0 : i32
    %c0_i32_0 = arith.constant 0 : i32
    %c0_i32_1 = arith.constant 0 : i32
    return %c0_i32, %c0_i32_0 : i32, i32
  }
  func.func @transform_4(%arg0: i32, %arg1: i32) -> (i32, i32) {
    %c0_i32 = arith.constant 0 : i32
    %c0_i32_0 = arith.constant 0 : i32
    %c0_i32_1 = arith.constant 0 : i32
    return %c0_i32, %c0_i32_0 : i32, i32
  }
  func.func @transform_5(%arg0: i32, %arg1: i32) -> (i32, i32) {
    %c0_i32 = arith.constant 0 : i32
    %c0_i32_0 = arith.constant 0 : i32
    %c0_i32_1 = arith.constant 0 : i32
    return %c0_i32, %c0_i32_0 : i32, i32
  }
  func.func @transform_6(%arg0: i32, %arg1: i32) -> (i32, i32, i32) {
    %c0_i32 = arith.constant 0 : i32
    %c0_i32_0 = arith.constant 0 : i32
    %c0_i32_1 = arith.constant 0 : i32
    return %arg0, %c0_i32, %c0_i32_0 : i32, i32, i32
  }
}

</mosaic_0001>

<llo_original>
// kernel: gated_pooling_forward.1
$region0: #{gated_pooling_forward.1}
  #allocation0 [shape = 'u32[]', space=smem, size = 0x4, offset = 0x4, fixed_abs, tag = 'smem constant byte address 0x4 - core index']
  #allocation1 [shape = 'u32[144,128]{1,0:T(1,128)}', space=vmem, size = 0x12000, scoped, tag = 'internal scratch']
  #allocation2 [shape = 'f32[4,32]{1,0:T(4,128)}', space=vmem, size = 0x800, scoped, tag = 'scratch operand']
  #allocation3 [shape = 'f32[1,1]{1,0:T(1,128)S(1)}', space=vmem, size = 0x200, scoped, tag = 'scoped memory for gated_pooling_forward.1']
  %s0 = inlined_call_operand.vmem [shape: f32[200,32], index: 0, kind: input, shape index: {}]
  %s1 = inlined_call_operand.vmem [shape: s32[1,200], index: 1, kind: input, shape index: {}]
  %s2 = inlined_call_operand.vmem [shape: f32[1,32], index: 2, kind: input, shape index: {}]
  %s3 = inlined_call_operand.<no memory space> [shape: f32[1,1], index: 3, kind: input, shape index: {}]
  %s4 = inlined_call_operand.vmem [shape: f32[32,16], index: 4, kind: input, shape index: {}]
  %s5 = inlined_call_operand.vmem [shape: f32[1,16], index: 5, kind: input, shape index: {}]
  %s6 = inlined_call_operand.hbm [shape: f32[1,4,16], index: 6, kind: output, shape index: {}]
  %s7 = sld [smem:[#allocation0]]
  $region42: #{gated_pooling_forward.1} parent=0
    _
  %s9 = ssub.s32 1, %s7
  %s10 = scalar_select 0, %s9, %s7
  %v11 = vstv %s3
  %12 = vst [vmem:[#allocation3] sm:$0x1] %v11
  $region1: #{gated_pooling_forward.1} parent=0
    #allocation4 [shape = 'u8[2048]{0}', space=vmem, size = 0x800, scoped, tag = 'output window, operand 0, single buffered']
    #allocation5 [shape = 's32[1]{0}', space=sflag, size = 0x4, scoped, tag = 'scoped memory for gated_pooling_forward.1']
    %13 = vsyncpa [#allocation5], 0
    // Predicated region
    $region2: #{gated_pooling_forward.1} parent=1 // pred_check
      _
    $region3: #{gated_pooling_forward.1} parent=1 // pred_check_branch
      %15 = sbr.rel (0) target = $region5
    $region4: #{gated_pooling_forward.1} parent=1 // pred_region
      %s16 = sadd.s32 0, 0
      %p17 = scmp.lt.s32.totalorder %s16, 0
      %s18 = scalar_select %p17, %s16, 0
      %s19 = smul.u32 32, %s18
      %s20 = ssub.s32 25, %s19
      %s21 = smul.u32 128, %s20
      %p22 = scmp.lt.s32.totalorder %s19, 24
      %s23 = scalar_select %p22, %s19, 24
      %s24 = smul.addr %s23, 8
      %s25 = scalar_lea.vmem %s0, %s24
      %s26 = sadd.s32 0, 0
      %p27 = scmp.lt.s32.totalorder %s26, 0
      %s28 = scalar_select %p27, %s26, 0
      %s29 = smul.u32 32, %s28
      %s30 = ssub.s32 25, %s29
      %s31 = smul.u32 128, %s30
    $region5: #{gated_pooling_forward.1} parent=1 // pred_fallthru
      _
    // Predicated region
    $region6: #{gated_pooling_forward.1} parent=1 // pred_check
      _
    $region7: #{gated_pooling_forward.1} parent=1 // pred_check_branch
      %33 = sbr.rel (0) target = $region9
    $region8: #{gated_pooling_forward.1} parent=1 // pred_region
      %s34 = sadd.s32 0, 0
      %p35 = scmp.lt.s32.totalorder %s34, 0
      %s36 = scalar_select %p35, %s34, 0
      %s37 = smul.u32 2, %s36
      %p38 = scmp.lt.s32.totalorder %s37, 1
      %s39 = scalar_select %p38, %s37, 1
      %s40 = scalar_lea.vmem %s1, %s39
      %s41 = sadd.s32 0, 0
      %p42 = scmp.lt.s32.totalorder %s41, 0
      %s43 = scalar_select %p42, %s41, 0
      %s44 = smul.u32 2, %s43
    $region9: #{gated_pooling_forward.1} parent=1 // pred_fallthru
      _
    // Predicated region
    $region10: #{gated_pooling_forward.1} parent=1 // pred_check
      _
    $region11: #{gated_pooling_forward.1} parent=1 // pred_check_branch
      %46 = sbr.rel (0) target = $region13
    $region12: #{gated_pooling_forward.1} parent=1 // pred_region
      _
    $region13: #{gated_pooling_forward.1} parent=1 // pred_fallthru
      _
    // Predicated region
    $region14: #{gated_pooling_forward.1} parent=1 // pred_check
      _
    $region15: #{gated_pooling_forward.1} parent=1 // pred_check_branch
      %48 = sbr.rel (0) target = $region17
    $region16: #{gated_pooling_forward.1} parent=1 // pred_region
      _
    $region17: #{gated_pooling_forward.1} parent=1 // pred_fallthru
      _
    // Predicated region
    $region18: #{gated_pooling_forward.1} parent=1 // pred_check
      _
    $region19: #{gated_pooling_forward.1} parent=1 // pred_check_branch
      %50 = sbr.rel (0) target = $region21
    $region20: #{gated_pooling_forward.1} parent=1 // pred_region
      _
    $region21: #{gated_pooling_forward.1} parent=1 // pred_fallthru
      _
    // Predicated region
    $region22: #{gated_pooling_forward.1} parent=1 // pred_check
      _
    $region23: #{gated_pooling_forward.1} parent=1 // pred_check_branch
      %52 = sbr.rel (0) target = $region25
    $region24: #{gated_pooling_forward.1} parent=1 // pred_region
      _
    $region25: #{gated_pooling_forward.1} parent=1 // pred_fallthru
      _
    %s53 = sadd.s32 0, 0
    %p54 = scmp.lt.s32.totalorder %s53, 0
    %s55 = scalar_select %p54, %s53, 0
    %s56 = smul.u32 32, %s55
    %s57 = ssub.s32 25, %s56
    %s58 = smul.u32 128, %s57
    %p59 = scmp.lt.s32.totalorder %s56, 24
    %s60 = scalar_select %p59, %s56, 24
    %s61 = smul.addr %s60, 8
    %s62 = scalar_lea.vmem %s0, %s61
    %s63 = sadd.s32 0, 0
    %p64 = scmp.lt.s32.totalorder %s63, 0
    %s65 = scalar_select %p64, %s63, 0
    %s66 = smul.u32 2, %s65
    %p67 = scmp.lt.s32.totalorder %s66, 1
    %s68 = scalar_select %p67, %s66, 1
    %s69 = scalar_lea.vmem %s1, %s68
    %s70 = sadd.s32 0, 0
    %p71 = scmp.lt.s32.totalorder %s70, 0
    %s72 = scalar_select %p71, %s70, 0
    %s73 = smul.u32 32, %s72
    %s74 = ssub.s32 25, %s73
    %s75 = smul.u32 128, %s74
    %p76 = scmp.lt.s32.totalorder %s73, 24
    %s77 = scalar_select %p76, %s73, 24
    %s78 = smul.addr %s77, 8
    %s79 = scalar_lea.vmem %s0, %s78
    %s80 = sadd.s32 0, 0
    %p81 = scmp.lt.s32.totalorder %s80, 0
    %s82 = scalar_select %p81, %s80, 0
    %s83 = smul.u32 32, %s82
    %s84 = ssub.s32 25, %s83
    %s85 = smul.u32 128, %s84
    %s86 = sadd.s32 0, 0
    %p87 = scmp.lt.s32.totalorder %s86, 0
    %s88 = scalar_select %p87, %s86, 0
    %s89 = smul.u32 2, %s88
    %p90 = scmp.lt.s32.totalorder %s89, 1
    %s91 = scalar_select %p90, %s89, 1
    %s92 = scalar_lea.vmem %s1, %s91
    %s93 = sadd.s32 0, 0
    %p94 = scmp.lt.s32.totalorder %s93, 0
    %s95 = scalar_select %p94, %s93, 0
    %s96 = smul.u32 2, %s95
    %p97 = scmp.eq.s32.totalorder 0, 0
    // Predicated region
    $region26: #{gated_pooling_forward.1} parent=1 // pred_check
      %p98 = pneg %p97
    $region27: #{gated_pooling_forward.1} parent=1 // pred_check_branch
      %100 = sbr.rel (%p98) target = $region29
    $region28: #{gated_pooling_forward.1} parent=1 // pred_region
      %vm101 = vcmask 257024
      %102 = vst.msk [vmem:[#allocation2] sm:$0xf] %vm101, 0.0
    $region29: #{gated_pooling_forward.1} parent=1 // pred_fallthru
      _
    %v103 = vld [vmem:[%s79] sm:$0xff]
    %v104 = vld [vmem:[%s79 + $0x8] sm:$0xff]
    %v105 = vld [vmem:[%s79 + $0x10] sm:$0xff]
    %v106 = vld [vmem:[%s79 + $0x18] sm:$0xff]
    %v107 = vld [vmem:[%s79 + $0x20] sm:$0xff]
    %v108 = vld [vmem:[%s79 + $0x28] sm:$0xff]
    %v109 = vld [vmem:[%s79 + $0x30] sm:$0xff]
    %v110 = vld [vmem:[%s79 + $0x38] sm:$0xff]
    %v111 = vld [vmem:[%s79 + $0x40] sm:$0xff]
    %v112 = vld [vmem:[%s79 + $0x48] sm:$0xff]
    %v113 = vld [vmem:[%s79 + $0x50] sm:$0xff]
    %v114 = vld [vmem:[%s79 + $0x58] sm:$0xff]
    %v115 = vld [vmem:[%s79 + $0x60] sm:$0xff]
    %v116 = vld [vmem:[%s79 + $0x68] sm:$0xff]
    %v117 = vld [vmem:[%s79 + $0x70] sm:$0xff]
    %v118 = vld [vmem:[%s79 + $0x78] sm:$0xff]
    %v119 = vld [vmem:[%s79 + $0x80] sm:$0xff]
    %v120 = vld [vmem:[%s79 + $0x88] sm:$0xff]
    %v121 = vld [vmem:[%s79 + $0x90] sm:$0xff]
    %v122 = vld [vmem:[%s79 + $0x98] sm:$0xff]
    %v123 = vld [vmem:[%s79 + $0xa0] sm:$0xff]
    %v124 = vld [vmem:[%s79 + $0xa8] sm:$0xff]
    %v125 = vld [vmem:[%s79 + $0xb0] sm:$0xff]
    %v126 = vld [vmem:[%s79 + $0xb8] sm:$0xff]
    %v127 = vld [vmem:[%s79 + $0xc0] sm:$0xff]
    %v128 = vld [vmem:[%s79 + $0xc8] sm:$0xff]
    %v129 = vld [vmem:[%s79 + $0xd0] sm:$0xff]
    %v130 = vld [vmem:[%s79 + $0xd8] sm:$0xff]
    %v131 = vld [vmem:[%s79 + $0xe0] sm:$0xff]
    %v132 = vld [vmem:[%s79 + $0xe8] sm:$0xff]
    %v133 = vld [vmem:[%s79 + $0xf0] sm:$0xff]
    %v134 = vld [vmem:[%s79 + $0xf8] sm:$0xff]
    %s135 = sadd.s32 0, 0
    %s136 = smul.u32 %s135, 256
    %v137 = vlaneseq
    %v138 = vshrl.u32 %v137, 7
    %v139 = vadd.s32 %v138, 8
    %v140 = vadd.s32 %v138, 16
    %v141 = vadd.s32 %v138, 24
    %v142 = vadd.s32 %v138, 32
    %v143 = vadd.s32 %v138, 40
    %v144 = vadd.s32 %v138, 48
    %v145 = vadd.s32 %v138, 56
    %v146 = vadd.s32 %v138, 64
    %v147 = vadd.s32 %v138, 72
    %v148 = vadd.s32 %v138, 80
    %v149 = vadd.s32 %v138, 88
    %v150 = vadd.s32 %v138, 96
    %v151 = vadd.s32 %v138, 104
    %v152 = vadd.s32 %v138, 112
    %v153 = vadd.s32 %v138, 120
    %v154 = vadd.s32 %v138, 128
    %v155 = vadd.s32 %v138, 136
    %v156 = vadd.s32 %v138, 144
    %v157 = vadd.s32 %v138, 152
    %v158 = vadd.s32 %v138, 160
    %v159 = vadd.s32 %v138, 168
    %v160 = vadd.s32 %v138, 176
    %v161 = vadd.s32 %v138, 184
    %v162 = vadd.s32 %v138, 192
    %v163 = vadd.s32 %v138, 200
    %v164 = vadd.s32 %v138, 208
    %v165 = vadd.s32 %v138, 216
    %v166 = vadd.s32 %v138, 224
    %v167 = vadd.s32 %v138, 232
    %v168 = vadd.s32 %v138, 240
    %v169 = vadd.s32 %v138, 248
    %v170 = vstv %s136
    %v171 = vadd.s32 %v138, %v170
    %v172 = vadd.s32 %v139, %v170
    %v173 = vadd.s32 %v140, %v170
    %v174 = vadd.s32 %v141, %v170
    %v175 = vadd.s32 %v142, %v170
    %v176 = vadd.s32 %v143, %v170
    %v177 = vadd.s32 %v144, %v170
    %v178 = vadd.s32 %v145, %v170
    %v179 = vadd.s32 %v146, %v170
    %v180 = vadd.s32 %v147, %v170
    %v181 = vadd.s32 %v148, %v170
    %v182 = vadd.s32 %v149, %v170
    %v183 = vadd.s32 %v150, %v170
    %v184 = vadd.s32 %v151, %v170
    %v185 = vadd.s32 %v152, %v170
    %v186 = vadd.s32 %v153, %v170
    %v187 = vadd.s32 %v154, %v170
    %v188 = vadd.s32 %v155, %v170
    %v189 = vadd.s32 %v156, %v170
    %v190 = vadd.s32 %v157, %v170
    %v191 = vadd.s32 %v158, %v170
    %v192 = vadd.s32 %v159, %v170
    %v193 = vadd.s32 %v160, %v170
    %v194 = vadd.s32 %v161, %v170
    %v195 = vadd.s32 %v162, %v170
    %v196 = vadd.s32 %v163, %v170
    %v197 = vadd.s32 %v164, %v170
    %v198 = vadd.s32 %v165, %v170
    %v199 = vadd.s32 %v166, %v170
    %v200 = vadd.s32 %v167, %v170
    %v201 = vadd.s32 %v168, %v170
    %v202 = vadd.s32 %v169, %v170
    %vm203 = vcmp.lt.s32.totalorder %v171, 200
    %vm204 = vcmp.lt.s32.totalorder %v172, 200
    %vm205 = vcmp.lt.s32.totalorder %v173, 200
    %vm206 = vcmp.lt.s32.totalorder %v174, 200
    %vm207 = vcmp.lt.s32.totalorder %v175, 200
    %vm208 = vcmp.lt.s32.totalorder %v176, 200
    %vm209 = vcmp.lt.s32.totalorder %v177, 200
    %vm210 = vcmp.lt.s32.totalorder %v178, 200
    %vm211 = vcmp.lt.s32.totalorder %v179, 200
    %vm212 = vcmp.lt.s32.totalorder %v180, 200
    %vm213 = vcmp.lt.s32.totalorder %v181, 200
    %vm214 = vcmp.lt.s32.totalorder %v182, 200
    %vm215 = vcmp.lt.s32.totalorder %v183, 200
    %vm216 = vcmp.lt.s32.totalorder %v184, 200
    %vm217 = vcmp.lt.s32.totalorder %v185, 200
    %vm218 = vcmp.lt.s32.totalorder %v186, 200
    %vm219 = vcmp.lt.s32.totalorder %v187, 200
    %vm220 = vcmp.lt.s32.totalorder %v188, 200
    %vm221 = vcmp.lt.s32.totalorder %v189, 200
    %vm222 = vcmp.lt.s32.totalorder %v190, 200
    %vm223 = vcmp.lt.s32.totalorder %v191, 200
    %vm224 = vcmp.lt.s32.totalorder %v192, 200
    %vm225 = vcmp.lt.s32.totalorder %v193, 200
    %vm226 = vcmp.lt.s32.totalorder %v194, 200
    %vm227 = vcmp.lt.s32.totalorder %v195, 200
    %vm228 = vcmp.lt.s32.totalorder %v196, 200
    %vm229 = vcmp.lt.s32.totalorder %v197, 200
    %vm230 = vcmp.lt.s32.totalorder %v198, 200
    %vm231 = vcmp.lt.s32.totalorder %v199, 200
    %vm232 = vcmp.lt.s32.totalorder %v200, 200
    %vm233 = vcmp.lt.s32.totalorder %v201, 200
    %vm234 = vcmp.lt.s32.totalorder %v202, 200
    %v235 = vsel %vm203, 1, 0
    %v236 = vsel %vm204, 1, 0
    %v237 = vsel %vm205, 1, 0
    %v238 = vsel %vm206, 1, 0
    %v239 = vsel %vm207, 1, 0
    %v240 = vsel %vm208, 1, 0
    %v241 = vsel %vm209, 1, 0
    %v242 = vsel %vm210, 1, 0
    %v243 = vsel %vm211, 1, 0
    %v244 = vsel %vm212, 1, 0
    %v245 = vsel %vm213, 1, 0
    %v246 = vsel %vm214, 1, 0
    %v247 = vsel %vm215, 1, 0
    %v248 = vsel %vm216, 1, 0
    %v249 = vsel %vm217, 1, 0
    %v250 = vsel %vm218, 1, 0
    %v251 = vsel %vm219, 1, 0
    %v252 = vsel %vm220, 1, 0
    %v253 = vsel %vm221, 1, 0
    %v254 = vsel %vm222, 1, 0
    %v255 = vsel %vm223, 1, 0
    %v256 = vsel %vm224, 1, 0
    %v257 = vsel %vm225, 1, 0
    %v258 = vsel %vm226, 1, 0
    %v259 = vsel %vm227, 1, 0
    %v260 = vsel %vm228, 1, 0
    %v261 = vsel %vm229, 1, 0
    %v262 = vsel %vm230, 1, 0
    %v263 = vsel %vm231, 1, 0
    %v264 = vsel %vm232, 1, 0
    %v265 = vsel %vm233, 1, 0
    %v266 = vsel %vm234, 1, 0
    %vm267 = vcmp.eq.s32.totalorder %v235, 1
    %vm268 = vcmp.eq.s32.totalorder %v236, 1
    %vm269 = vcmp.eq.s32.totalorder %v237, 1
    %vm270 = vcmp.eq.s32.totalorder %v238, 1
    %vm271 = vcmp.eq.s32.totalorder %v239, 1
    %vm272 = vcmp.eq.s32.totalorder %v240, 1
    %vm273 = vcmp.eq.s32.totalorder %v241, 1
    %vm274 = vcmp.eq.s32.totalorder %v242, 1
    %vm275 = vcmp.eq.s32.totalorder %v243, 1
    %vm276 = vcmp.eq.s32.totalorder %v244, 1
    %vm277 = vcmp.eq.s32.totalorder %v245, 1
    %vm278 = vcmp.eq.s32.totalorder %v246, 1
    %vm279 = vcmp.eq.s32.totalorder %v247, 1
    %vm280 = vcmp.eq.s32.totalorder %v248, 1
    %vm281 = vcmp.eq.s32.totalorder %v249, 1
    %vm282 = vcmp.eq.s32.totalorder %v250, 1
    %vm283 = vcmp.eq.s32.totalorder %v251, 1
    %vm284 = vcmp.eq.s32.totalorder %v252, 1
    %vm285 = vcmp.eq.s32.totalorder %v253, 1
    %vm286 = vcmp.eq.s32.totalorder %v254, 1
    %vm287 = vcmp.eq.s32.totalorder %v255, 1
    %vm288 = vcmp.eq.s32.totalorder %v256, 1
    %vm289 = vcmp.eq.s32.totalorder %v257, 1
    %vm290 = vcmp.eq.s32.totalorder %v258, 1
    %vm291 = vcmp.eq.s32.totalorder %v259, 1
    %vm292 = vcmp.eq.s32.totalorder %v260, 1
    %vm293 = vcmp.eq.s32.totalorder %v261, 1
    %vm294 = vcmp.eq.s32.totalorder %v262, 1
    %vm295 = vcmp.eq.s32.totalorder %v263, 1
    %vm296 = vcmp.eq.s32.totalorder %v264, 1
    %vm297 = vcmp.eq.s32.totalorder %v265, 1
    %vm298 = vcmp.eq.s32.totalorder %v266, 1
    %v299 = vsel %vm267, %v103, 0.0
    %v300 = vsel %vm268, %v104, 0.0
    %v301 = vsel %vm269, %v105, 0.0
    %v302 = vsel %vm270, %v106, 0.0
    %v303 = vsel %vm271, %v107, 0.0
    %v304 = vsel %vm272, %v108, 0.0
    %v305 = vsel %vm273, %v109, 0.0
    %v306 = vsel %vm274, %v110, 0.0
    %v307 = vsel %vm275, %v111, 0.0
    %v308 = vsel %vm276, %v112, 0.0
    %v309 = vsel %vm277, %v113, 0.0
    %v310 = vsel %vm278, %v114, 0.0
    %v311 = vsel %vm279, %v115, 0.0
    %v312 = vsel %vm280, %v116, 0.0
    %v313 = vsel %vm281, %v117, 0.0
    %v314 = vsel %vm282, %v118, 0.0
    %v315 = vsel %vm283, %v119, 0.0
    %v316 = vsel %vm284, %v120, 0.0
    %v317 = vsel %vm285, %v121, 0.0
    %v318 = vsel %vm286, %v122, 0.0
    %v319 = vsel %vm287, %v123, 0.0
    %v320 = vsel %vm288, %v124, 0.0
    %v321 = vsel %vm289, %v125, 0.0
    %v322 = vsel %vm290, %v126, 0.0
    %v323 = vsel %vm291, %v127, 0.0
    %v324 = vsel %vm292, %v128, 0.0
    %v325 = vsel %vm293, %v129, 0.0
    %v326 = vsel %vm294, %v130, 0.0
    %v327 = vsel %vm295, %v131, 0.0
    %v328 = vsel %vm296, %v132, 0.0
    %v329 = vsel %vm297, %v133, 0.0
    %v330 = vsel %vm298, %v134, 0.0
    %v331 = vld [vmem:[%s2] sm:$0x1]
    %v333 = vlaneseq
    %v334 = vshrl.u32 %v333, 7
    %v335 = vsub.s32 0, %v334
    %v336 = vrot.slane %v331, %v335
    %v338 = vmul.f32 %v299, %v336
    %v339 = vmul.f32 %v300, %v336
    %v340 = vmul.f32 %v301, %v336
    %v341 = vmul.f32 %v302, %v336
    %v342 = vmul.f32 %v303, %v336
    %v343 = vmul.f32 %v304, %v336
    %v344 = vmul.f32 %v305, %v336
    %v345 = vmul.f32 %v306, %v336
    %v346 = vmul.f32 %v307, %v336
    %v347 = vmul.f32 %v308, %v336
    %v348 = vmul.f32 %v309, %v336
    %v349 = vmul.f32 %v310, %v336
    %v350 = vmul.f32 %v311, %v336
    %v351 = vmul.f32 %v312, %v336
    %v352 = vmul.f32 %v313, %v336
    %v353 = vmul.f32 %v314, %v336
    %v354 = vmul.f32 %v315, %v336
    %v355 = vmul.f32 %v316, %v336
    %v356 = vmul.f32 %v317, %v336
    %v357 = vmul.f32 %v318, %v336
    %v358 = vmul.f32 %v319, %v336
    %v359 = vmul.f32 %v320, %v336
    %v360 = vmul.f32 %v321, %v336
    %v361 = vmul.f32 %v322, %v336
    %v362 = vmul.f32 %v323, %v336
    %v363 = vmul.f32 %v324, %v336
    %v364 = vmul.f32 %v325, %v336
    %v365 = vmul.f32 %v326, %v336
    %v366 = vmul.f32 %v327, %v336
    %v367 = vmul.f32 %v328, %v336
    %v368 = vmul.f32 %v329, %v336
    %v369 = vmul.f32 %v330, %v336
    %vm370 = vcmask 261120
    %v371 = vsel %vm370, %v338, 0.0
    %372 = vadd.xlane.f32.xlu0 %v371
    %v373 = vpop.xlane.xlu0 %372
    %v374 = vsel %vm370, %v339, 0.0
    %375 = vadd.xlane.f32.xlu0 %v374
    %v376 = vpop.xlane.xlu0 %375
    %v377 = vsel %vm370, %v340, 0.0
    %378 = vadd.xlane.f32.xlu0 %v377
    %v379 = vpop.xlane.xlu0 %378
    %v380 = vsel %vm370, %v341, 0.0
    %381 = vadd.xlane.f32.xlu0 %v380
    %v382 = vpop.xlane.xlu0 %381
    %v383 = vsel %vm370, %v342, 0.0
    %384 = vadd.xlane.f32.xlu0 %v383
    %v385 = vpop.xlane.xlu0 %384
    %v386 = vsel %vm370, %v343, 0.0
    %387 = vadd.xlane.f32.xlu0 %v386
    %v388 = vpop.xlane.xlu0 %387
    %v389 = vsel %vm370, %v344, 0.0
    %390 = vadd.xlane.f32.xlu0 %v389
    %v391 = vpop.xlane.xlu0 %390
    %v392 = vsel %vm370, %v345, 0.0
    %393 = vadd.xlane.f32.xlu0 %v392
    %v394 = vpop.xlane.xlu0 %393
    %v395 = vsel %vm370, %v346, 0.0
    %396 = vadd.xlane.f32.xlu0 %v395
    %v397 = vpop.xlane.xlu0 %396
    %v398 = vsel %vm370, %v347, 0.0
    %399 = vadd.xlane.f32.xlu0 %v398
    %v400 = vpop.xlane.xlu0 %399
    %v401 = vsel %vm370, %v348, 0.0
    %402 = vadd.xlane.f32.xlu0 %v401
    %v403 = vpop.xlane.xlu0 %402
    %v404 = vsel %vm370, %v349, 0.0
    %405 = vadd.xlane.f32.xlu0 %v404
    %v406 = vpop.xlane.xlu0 %405
    %v407 = vsel %vm370, %v350, 0.0
    %408 = vadd.xlane.f32.xlu0 %v407
    %v409 = vpop.xlane.xlu0 %408
    %v410 = vsel %vm370, %v351, 0.0
    %411 = vadd.xlane.f32.xlu0 %v410
    %v412 = vpop.xlane.xlu0 %411
    %v413 = vsel %vm370, %v352, 0.0
    %414 = vadd.xlane.f32.xlu0 %v413
    %v415 = vpop.xlane.xlu0 %414
    %v416 = vsel %vm370, %v353, 0.0
    %417 = vadd.xlane.f32.xlu0 %v416
    %v418 = vpop.xlane.xlu0 %417
    %v419 = vsel %vm370, %v354, 0.0
    %420 = vadd.xlane.f32.xlu0 %v419
    %v421 = vpop.xlane.xlu0 %420
    %v422 = vsel %vm370, %v355, 0.0
    %423 = vadd.xlane.f32.xlu0 %v422
    %v424 = vpop.xlane.xlu0 %423
    %v425 = vsel %vm370, %v356, 0.0
    %426 = vadd.xlane.f32.xlu0 %v425
    %v427 = vpop.xlane.xlu0 %426
    %v428 = vsel %vm370, %v357, 0.0
    %429 = vadd.xlane.f32.xlu0 %v428
    %v430 = vpop.xlane.xlu0 %429
    %v431 = vsel %vm370, %v358, 0.0
    %432 = vadd.xlane.f32.xlu0 %v431
    %v433 = vpop.xlane.xlu0 %432
    %v434 = vsel %vm370, %v359, 0.0
    %435 = vadd.xlane.f32.xlu0 %v434
    %v436 = vpop.xlane.xlu0 %435
    %v437 = vsel %vm370, %v360, 0.0
    %438 = vadd.xlane.f32.xlu0 %v437
    %v439 = vpop.xlane.xlu0 %438
    %v440 = vsel %vm370, %v361, 0.0
    %441 = vadd.xlane.f32.xlu0 %v440
    %v442 = vpop.xlane.xlu0 %441
    %v443 = vsel %vm370, %v362, 0.0
    %444 = vadd.xlane.f32.xlu0 %v443
    %v445 = vpop.xlane.xlu0 %444
    %v446 = vsel %vm370, %v363, 0.0
    %447 = vadd.xlane.f32.xlu0 %v446
    %v448 = vpop.xlane.xlu0 %447
    %v449 = vsel %vm370, %v364, 0.0
    %450 = vadd.xlane.f32.xlu0 %v449
    %v451 = vpop.xlane.xlu0 %450
    %v452 = vsel %vm370, %v365, 0.0
    %453 = vadd.xlane.f32.xlu0 %v452
    %v454 = vpop.xlane.xlu0 %453
    %v455 = vsel %vm370, %v366, 0.0
    %456 = vadd.xlane.f32.xlu0 %v455
    %v457 = vpop.xlane.xlu0 %456
    %v458 = vsel %vm370, %v367, 0.0
    %459 = vadd.xlane.f32.xlu0 %v458
    %v460 = vpop.xlane.xlu0 %459
    %v461 = vsel %vm370, %v368, 0.0
    %462 = vadd.xlane.f32.xlu0 %v461
    %v463 = vpop.xlane.xlu0 %462
    %v464 = vsel %vm370, %v369, 0.0
    %465 = vadd.xlane.f32.xlu0 %v464
    %v466 = vpop.xlane.xlu0 %465
    %v467 = vld [vmem:[#allocation3] sm:$0x1]
    %v469 = vlaneseq
    %v470 = vshrl.u32 %v469, 7
    %v471 = vsub.s32 0, %v470
    %v472 = vrot.slane %v467, %v471
    %v474 = vadd.f32 %v373, %v472
    %v475 = vadd.f32 %v376, %v472
    %v476 = vadd.f32 %v379, %v472
    %v477 = vadd.f32 %v382, %v472
    %v478 = vadd.f32 %v385, %v472
    %v479 = vadd.f32 %v388, %v472
    %v480 = vadd.f32 %v391, %v472
    %v481 = vadd.f32 %v394, %v472
    %v482 = vadd.f32 %v397, %v472
    %v483 = vadd.f32 %v400, %v472
    %v484 = vadd.f32 %v403, %v472
    %v485 = vadd.f32 %v406, %v472
    %v486 = vadd.f32 %v409, %v472
    %v487 = vadd.f32 %v412, %v472
    %v488 = vadd.f32 %v415, %v472
    %v489 = vadd.f32 %v418, %v472
    %v490 = vadd.f32 %v421, %v472
    %v491 = vadd.f32 %v424, %v472
    %v492 = vadd.f32 %v427, %v472
    %v493 = vadd.f32 %v430, %v472
    %v494 = vadd.f32 %v433, %v472
    %v495 = vadd.f32 %v436, %v472
    %v496 = vadd.f32 %v439, %v472
    %v497 = vadd.f32 %v442, %v472
    %v498 = vadd.f32 %v445, %v472
    %v499 = vadd.f32 %v448, %v472
    %v500 = vadd.f32 %v451, %v472
    %v501 = vadd.f32 %v454, %v472
    %v502 = vadd.f32 %v457, %v472
    %v503 = vadd.f32 %v460, %v472
    %v504 = vadd.f32 %v463, %v472
    %v505 = vadd.f32 %v466, %v472
    %507 = vset.pattern.permute.xlu0 0
    %508 = vperm.xlu0 %507, %v474
    %v509 = vpop.permute.xlu0 %508
    %512 = vset.pattern.permute.xlu0 0
    %513 = vperm.xlu0 %512, %v475
    %v514 = vpop.permute.xlu0 %513
    %517 = vset.pattern.permute.xlu0 0
    %518 = vperm.xlu0 %517, %v476
    %v519 = vpop.permute.xlu0 %518
    %522 = vset.pattern.permute.xlu0 0
    %523 = vperm.xlu0 %522, %v477
    %v524 = vpop.permute.xlu0 %523
    %527 = vset.pattern.permute.xlu0 0
    %528 = vperm.xlu0 %527, %v478
    %v529 = vpop.permute.xlu0 %528
    %532 = vset.pattern.permute.xlu0 0
    %533 = vperm.xlu0 %532, %v479
    %v534 = vpop.permute.xlu0 %533
    %537 = vset.pattern.permute.xlu0 0
    %538 = vperm.xlu0 %537, %v480
    %v539 = vpop.permute.xlu0 %538
    %542 = vset.pattern.permute.xlu0 0
    %543 = vperm.xlu0 %542, %v481
    %v544 = vpop.permute.xlu0 %543
    %547 = vset.pattern.permute.xlu0 0
    %548 = vperm.xlu0 %547, %v482
    %v549 = vpop.permute.xlu0 %548
    %552 = vset.pattern.permute.xlu0 0
    %553 = vperm.xlu0 %552, %v483
    %v554 = vpop.permute.xlu0 %553
    %557 = vset.pattern.permute.xlu0 0
    %558 = vperm.xlu0 %557, %v484
    %v559 = vpop.permute.xlu0 %558
    %562 = vset.pattern.permute.xlu0 0
    %563 = vperm.xlu0 %562, %v485
    %v564 = vpop.permute.xlu0 %563
    %567 = vset.pattern.permute.xlu0 0
    %568 = vperm.xlu0 %567, %v486
    %v569 = vpop.permute.xlu0 %568
    %572 = vset.pattern.permute.xlu0 0
    %573 = vperm.xlu0 %572, %v487
    %v574 = vpop.permute.xlu0 %573
    %577 = vset.pattern.permute.xlu0 0
    %578 = vperm.xlu0 %577, %v488
    %v579 = vpop.permute.xlu0 %578
    %582 = vset.pattern.permute.xlu0 0
    %583 = vperm.xlu0 %582, %v489
    %v584 = vpop.permute.xlu0 %583
    %587 = vset.pattern.permute.xlu0 0
    %588 = vperm.xlu0 %587, %v490
    %v589 = vpop.permute.xlu0 %588
    %592 = vset.pattern.permute.xlu0 0
    %593 = vperm.xlu0 %592, %v491
    %v594 = vpop.permute.xlu0 %593
    %597 = vset.pattern.permute.xlu0 0
    %598 = vperm.xlu0 %597, %v492
    %v599 = vpop.permute.xlu0 %598
    %602 = vset.pattern.permute.xlu0 0
    %603 = vperm.xlu0 %602, %v493
    %v604 = vpop.permute.xlu0 %603
    %607 = vset.pattern.permute.xlu0 0
    %608 = vperm.xlu0 %607, %v494
    %v609 = vpop.permute.xlu0 %608
    %612 = vset.pattern.permute.xlu0 0
    %613 = vperm.xlu0 %612, %v495
    %v614 = vpop.permute.xlu0 %613
    %617 = vset.pattern.permute.xlu0 0
    %618 = vperm.xlu0 %617, %v496
    %v619 = vpop.permute.xlu0 %618
    %622 = vset.pattern.permute.xlu0 0
    %623 = vperm.xlu0 %622, %v497
    %v624 = vpop.permute.xlu0 %623
    %627 = vset.pattern.permute.xlu0 0
    %628 = vperm.xlu0 %627, %v498
    %v629 = vpop.permute.xlu0 %628
    %632 = vset.pattern.permute.xlu0 0
    %633 = vperm.xlu0 %632, %v499
    %v634 = vpop.permute.xlu0 %633
    %637 = vset.pattern.permute.xlu0 0
    %638 = vperm.xlu0 %637, %v500
    %v639 = vpop.permute.xlu0 %638
    %642 = vset.pattern.permute.xlu0 0
    %643 = vperm.xlu0 %642, %v501
    %v644 = vpop.permute.xlu0 %643
    %647 = vset.pattern.permute.xlu0 0
    %648 = vperm.xlu0 %647, %v502
    %v649 = vpop.permute.xlu0 %648
    %652 = vset.pattern.permute.xlu0 0
    %653 = vperm.xlu0 %652, %v503
    %v654 = vpop.permute.xlu0 %653
    %657 = vset.pattern.permute.xlu0 0
    %658 = vperm.xlu0 %657, %v504
    %v659 = vpop.permute.xlu0 %658
    %662 = vset.pattern.permute.xlu0 0
    %663 = vperm.xlu0 %662, %v505
    %v664 = vpop.permute.xlu0 %663
    %v666 = vmul.f32 %v299, %v509
    %v667 = vmul.f32 %v300, %v514
    %v668 = vmul.f32 %v301, %v519
    %v669 = vmul.f32 %v302, %v524
    %v670 = vmul.f32 %v303, %v529
    %v671 = vmul.f32 %v304, %v534
    %v672 = vmul.f32 %v305, %v539
    %v673 = vmul.f32 %v306, %v544
    %v674 = vmul.f32 %v307, %v549
    %v675 = vmul.f32 %v308, %v554
    %v676 = vmul.f32 %v309, %v559
    %v677 = vmul.f32 %v310, %v564
    %v678 = vmul.f32 %v311, %v569
    %v679 = vmul.f32 %v312, %v574
    %v680 = vmul.f32 %v313, %v579
    %v681 = vmul.f32 %v314, %v584
    %v682 = vmul.f32 %v315, %v589
    %v683 = vmul.f32 %v316, %v594
    %v684 = vmul.f32 %v317, %v599
    %v685 = vmul.f32 %v318, %v604
    %v686 = vmul.f32 %v319, %v609
    %v687 = vmul.f32 %v320, %v614
    %v688 = vmul.f32 %v321, %v619
    %v689 = vmul.f32 %v322, %v624
    %v690 = vmul.f32 %v323, %v629
    %v691 = vmul.f32 %v324, %v634
    %v692 = vmul.f32 %v325, %v639
    %v693 = vmul.f32 %v326, %v644
    %v694 = vmul.f32 %v327, %v649
    %v695 = vmul.f32 %v328, %v654
    %v696 = vmul.f32 %v329, %v659
    %v697 = vmul.f32 %v330, %v664
    %v698 = vld [vmem:[%s92] sm:$0x3]
    %v699 = vlaneseq
    %v700 = vshrl.u32 %v699, 7
    %v701 = vsub.s32 0, %v700
    %v702 = vrot.slane %v698, %v701
    %v703 = vlaneseq
    %v704 = vshrl.u32 %v703, 7
    %v705 = vsub.s32 1, %v704
    %v706 = vrot.slane %v698, %v705
    %vm707 = vcmp.eq.s32.totalorder %v138, %v702
    %vm708 = vcmp.eq.s32.totalorder %v138, %v706
    %v709 = vsel %vm707, 1, 0
    %v710 = vsel %vm708, 1, 0
    %v711 = vcvt.s32.f32 %v709
    %v712 = vcvt.s32.f32 %v710
    %713 = vmatprep.subr.mxu0 0.0
    %714 = vmatpush1.msra.mxu0 %v666
    %715 = vmatprep.subr.mxu0 0.0
    %716 = vmatpush1.msra.mxu0 %v667
    %717 = vmatprep.subr.mxu0 0.0
    %718 = vmatpush1.msra.mxu0 %v668
    %719 = vmatprep.subr.mxu0 0.0
    %720 = vmatpush1.msra.mxu0 %v669
    %721 = vmatprep.subr.mxu0 0.0
    %722 = vmatpush1.msra.mxu0 %v670
    %723 = vmatprep.subr.mxu0 0.0
    %724 = vmatpush1.msra.mxu0 %v671
    %725 = vmatprep.subr.mxu0 0.0
    %726 = vmatpush1.msra.mxu0 %v672
    %727 = vmatprep.subr.mxu0 0.0
    %728 = vmatpush1.msra.mxu0 %v673
    %729 = vmatprep.subr.mxu0 0.0
    %730 = vmatpush1.msra.mxu0 %v674
    %731 = vmatprep.subr.mxu0 0.0
    %732 = vmatpush1.msra.mxu0 %v675
    %733 = vmatprep.subr.mxu0 0.0
    %734 = vmatpush1.msra.mxu0 %v676
    %735 = vmatprep.subr.mxu0 0.0
    %736 = vmatpush1.msra.mxu0 %v677
    %737 = vmatprep.subr.mxu0 0.0
    %738 = vmatpush1.msra.mxu0 %v678
    %739 = vmatprep.subr.mxu0 0.0
    %740 = vmatpush1.msra.mxu0 %v679
    %741 = vmatprep.subr.mxu0 0.0
    %742 = vmatpush1.msra.mxu0 %v680
    %743 = vmatprep.subr.mxu0 0.0
    %744 = vmatpush1.msra.mxu0 %v681
    %745 = vmatprep.subr.mxu0 0.0
    %746 = vmatpush1.msra.mxu0 %v682
    %747 = vmatprep.subr.mxu0 0.0
    %748 = vmatpush1.msra.mxu0 %v683
    %749 = vmatprep.subr.mxu0 0.0
    %750 = vmatpush1.msra.mxu0 %v684
    %751 = vmatprep.subr.mxu0 0.0
    %752 = vmatpush1.msra.mxu0 %v685
    %753 = vmatprep.subr.mxu0 0.0
    %754 = vmatpush1.msra.mxu0 %v686
    %755 = vmatprep.subr.mxu0 0.0
    %756 = vmatpush1.msra.mxu0 %v687
    %757 = vmatprep.subr.mxu0 0.0
    %758 = vmatpush1.msra.mxu0 %v688
    %759 = vmatprep.subr.mxu0 0.0
    %760 = vmatpush1.msra.mxu0 %v689
    %761 = vmatprep.subr.mxu0 0.0
    %762 = vmatpush1.msra.mxu0 %v690
    %763 = vmatprep.subr.mxu0 0.0
    %764 = vmatpush1.msra.mxu0 %v691
    %765 = vmatprep.subr.mxu0 0.0
    %766 = vmatpush1.msra.mxu0 %v692
    %767 = vmatprep.subr.mxu0 0.0
    %768 = vmatpush1.msra.mxu0 %v693
    %769 = vmatprep.subr.mxu0 0.0
    %770 = vmatpush1.msra.mxu0 %v694
    %771 = vmatprep.subr.mxu0 0.0
    %772 = vmatpush1.msra.mxu0 %v695
    %773 = vmatprep.subr.mxu0 0.0
    %774 = vmatpush1.msra.mxu0 %v696
    %775 = vmatprep.subr.mxu0 0.0
    %776 = vmatpush1.msra.mxu0 %v697
    %777 = vmatprep.mubr.f32.mxu0 %v712
    %778 = vmatmul.mubr.f32.gmra.mrb[0].mxu0 %v711
    %v779 = vpop.f32.mrb[0].mxu0
    %v780 = vadd.f32 0.0, %v779
    %v781 = vpop.f32.mrb[0].mxu0
    %782 = vdwg.mxu0
    %v783 = vld [vmem:[#allocation2] sm:$0xf]
    %v784 = vadd.f32 %v783, %v780
    %vm785 = vcmask 257024
    %786 = vst.msk [vmem:[#allocation2] sm:$0xf] %vm785, %v784
    // Predicated region
    $region30: #{gated_pooling_forward.1} parent=1 // pred_check
      %p787 = pneg %p97
    $region31: #{gated_pooling_forward.1} parent=1 // pred_check_branch
      %789 = sbr.rel (%p787) target = $region33
    $region32: #{gated_pooling_forward.1} parent=1 // pred_region
      %v790 = vld [vmem:[#allocation2] sm:$0xf]
      %v791 = vld [vmem:[%s5] sm:$0x1]
      %p792 = scmp.eq.s32.totalorder 0, 0
      %s793 = scalar_select %p792, 1, 0
      %s794 = scvt.s32.f32 %s793
      %v795 = vstv %s794
      %v796 = vmul.f32 %v791, %v795
      %v797 = vld [vmem:[%s4] sm:$0xff]
      %v798 = vld [vmem:[%s4 + $0x8] sm:$0xff]
      %v799 = vld [vmem:[%s4 + $0x10] sm:$0xff]
      %v800 = vld [vmem:[%s4 + $0x18] sm:$0xff]
      %v802 = vlaneseq
      %v803 = vshrl.u32 %v802, 7
      %v804 = vsub.s32 0, %v803
      %v805 = vrot.slane %v796, %v804
      %v808 = vsel %vm370, %v790, 0
      %810 = vmatprep.subr.mxu0 0.0
      %811 = vmatpush1.msra.mxu0 %v797
      %812 = vmatprep.subr.mxu0 0.0
      %813 = vmatpush1.msra.mxu0 %v798
      %814 = vmatprep.subr.mxu0 0.0
      %815 = vmatpush1.msra.mxu0 %v799
      %816 = vmatprep.subr.mxu0 0.0
      %817 = vmatpush1.msra.mxu0 %v800
      %818 = vmatprep.subr.mxu0 0.0
      %819 = vmatpush1.msra.mxu0 0.0
      %820 = vmatprep.subr.mxu0 0.0
      %821 = vmatpush1.msra.mxu0 0.0
      %822 = vmatprep.subr.mxu0 0.0
      %823 = vmatpush1.msra.mxu0 0.0
      %824 = vmatprep.subr.mxu0 0.0
      %825 = vmatpush1.msra.mxu0 0.0
      %826 = vmatprep.subr.mxu0 0.0
      %827 = vmatpush1.msra.mxu0 0.0
      %828 = vmatprep.subr.mxu0 0.0
      %829 = vmatpush1.msra.mxu0 0.0
      %830 = vmatprep.subr.mxu0 0.0
      %831 = vmatpush1.msra.mxu0 0.0
      %832 = vmatprep.subr.mxu0 0.0
      %833 = vmatpush1.msra.mxu0 0.0
      %834 = vmatprep.subr.mxu0 0.0
      %835 = vmatpush1.msra.mxu0 0.0
      %836 = vmatprep.subr.mxu0 0.0
      %837 = vmatpush1.msra.mxu0 0.0
      %838 = vmatprep.subr.mxu0 0.0
      %839 = vmatpush1.msra.mxu0 0.0
      %840 = vmatprep.subr.mxu0 0.0
      %841 = vmatpush1.msra.mxu0 0.0
      %842 = vmatprep.subr.mxu0 0.0
      %843 = vmatpush1.msra.mxu0 0.0
      %844 = vmatprep.subr.mxu0 0.0
      %845 = vmatpush1.msra.mxu0 0.0
      %846 = vmatprep.subr.mxu0 0.0
      %847 = vmatpush1.msra.mxu0 0.0
      %848 = vmatprep.subr.mxu0 0.0
      %849 = vmatpush1.msra.mxu0 0.0
      %850 = vmatprep.subr.mxu0 0.0
      %851 = vmatpush1.msra.mxu0 0.0
      %852 = vmatprep.subr.mxu0 0.0
      %853 = vmatpush1.msra.mxu0 0.0
      %854 = vmatprep.subr.mxu0 0.0
      %855 = vmatpush1.msra.mxu0 0.0
      %856 = vmatprep.subr.mxu0 0.0
      %857 = vmatpush1.msra.mxu0 0.0
      %858 = vmatprep.subr.mxu0 0.0
      %859 = vmatpush1.msra.mxu0 0.0
      %860 = vmatprep.subr.mxu0 0.0
      %861 = vmatpush1.msra.mxu0 0.0
      %862 = vmatprep.subr.mxu0 0.0
      %863 = vmatpush1.msra.mxu0 0.0
      %864 = vmatprep.subr.mxu0 0.0
      %865 = vmatpush1.msra.mxu0 0.0
      %866 = vmatprep.subr.mxu0 0.0
      %867 = vmatpush1.msra.mxu0 0.0
      %868 = vmatprep.subr.mxu0 0.0
      %869 = vmatpush1.msra.mxu0 0.0
      %870 = vmatprep.subr.mxu0 0.0
      %871 = vmatpush1.msra.mxu0 0.0
      %872 = vmatprep.subr.mxu0 0.0
      %873 = vmatpush1.msra.mxu0 0.0
      %874 = vmatprep.mubr.f32.mxu0 0.0
      %875 = vmatmul.mubr.f32.gmra.mrb[0].mxu0 %v808
      %v876 = vpop.f32.mrb[0].mxu0
      %v877 = vadd.f32 %v805, %v876
      %v878 = vpop.f32.mrb[0].mxu0
      %879 = vdwg.mxu0
      %vm880 = vcmask 125952
      %881 = vst.msk [vmem:[#allocation4] sm:$0xf] %vm880, %v877
    $region33: #{gated_pooling_forward.1} parent=1 // pred_fallthru
      _
    // Predicated region
    $region34: #{gated_pooling_forward.1} parent=1 // pred_check
      _
    $region35: #{gated_pooling_forward.1} parent=1 // pred_check_branch
      %883 = sbr.rel (0) target = $region37
    $region36: #{gated_pooling_forward.1} parent=1 // pred_region
      %s885 = ssub.s32 64, 64
      %886 = vsyncadd [#allocation5], %s885
      %s888 = sshll.u32 [#allocation4], 4
      %s889 = int_to_ptr.vmem [resolvable:$true] %s888
      %891 = dma.vmem_to_hbm [thread:$0]  %s889, 64, %s6, [#allocation5]
    $region37: #{gated_pooling_forward.1} parent=1 // pred_fallthru
      _
    // Predicated region
    $region38: #{gated_pooling_forward.1} parent=1 // pred_check
      _
    $region39: #{gated_pooling_forward.1} parent=1 // pred_check_branch
      %893 = sbr.rel (0) target = $region41
    $region40: #{gated_pooling_forward.1} parent=1 // pred_region
      %894 = dma.done [#allocation5], 64
    $region41: #{gated_pooling_forward.1} parent=1 // pred_fallthru
      _
    %895 = vsyncpa [#allocation5], 1

</llo_original>
